<compile_context>
chip_gen: v5e
topology: v5e:2x2
jax: 0.10.0
libtpu: 0.0.40
codegen_flags: <defaults>
</compile_context>

<pallas_src>
import jax
import jax.numpy as jnp
from jax import lax
from jax.experimental import pallas as pl
from jax.experimental.pallas import tpu as pltpu

LANES = 128
SUBLANES = 8
_CHUNK_ROWS = 256  # inner MAC chunk: (256, 128) f32 = 128 KiB per operand


def _round_up(a, b):
    return ((a + b - 1) // b) * b


def _device_kind():
    try:
        return jax.devices()[0].device_kind.lower()
    except Exception:
        return ""


def _default_block_rows():
    kind = _device_kind()
    if "v7" in kind:
        return 8192   # 4 MiB/input/buffer: 3.2 TB/s HBM needs big steps
    return 4096       # 2 MiB/input/buffer: 8 MiB double-buffered, v5e-safe


def _num_tensorcores():
    kind = _device_kind()
    if "v7" in kind or "v4" in kind:
        return 2
    return 1


def _poisson_kernel(x_ref, w_ref, o_ref):
    """Accumulate dot(x_block, w_block) into the resident (1,8,128) output."""
    k = pl.program_id(1)

    @pl.when(k == 0)
    def _init():
        o_ref[...] = jnp.zeros_like(o_ref)

    block_rows = x_ref.shape[0]
    chunk = _CHUNK_ROWS if (block_rows % _CHUNK_ROWS == 0) else block_rows
    n_chunks = block_rows // chunk

    if n_chunks == 1:
        part = (x_ref[...] * w_ref[...]).reshape(-1, SUBLANES, LANES).sum(axis=0)
    else:
        def body(i, carry):
            r = pl.multiple_of(i * chunk, chunk)
            xs = x_ref[pl.ds(r, chunk), :]
            ws = w_ref[pl.ds(r, chunk), :]
            return carry + (xs * ws).reshape(-1, SUBLANES, LANES).sum(axis=0)

        part = lax.fori_loop(0, n_chunks, body,
                             jnp.zeros((SUBLANES, LANES), jnp.float32),
                             unroll=(n_chunks <= 16))

    o_ref[...] += part.reshape(1, SUBLANES, LANES)


def poisson_regression(x, coefficients, bias, *, block_rows=None,
                       min_pallas_features=None, force_pallas=False,
                       n_splits=None):
    """x: (N,), coefficients: (N,), bias: (1,) -> (1,) f32."""
    n = int(x.shape[0])
    xf = x.astype(jnp.float32)
    wf = coefficients.astype(jnp.float32)
    bf = bias.astype(jnp.float32).reshape(1)

    if block_rows is None:
        block_rows = _default_block_rows()
    block_rows = max(SUBLANES, _round_up(int(block_rows), SUBLANES))
    block_elems = block_rows * LANES

    if min_pallas_features is None:
        min_pallas_features = block_elems  # below one block, XLA fusion wins
    if n < min_pallas_features and not force_pallas:
        return jnp.exp(bf + jnp.dot(wf, xf))

    num_blocks = n // block_elems
    tail = jnp.float32(0.0)
    if num_blocks == 0:
        # Forced tiny case: pad up to a single block (pad cost is negligible).
        pad = block_elems - n
        x_main = jnp.pad(xf, (0, pad)).reshape(block_rows, LANES)
        w_main = jnp.pad(wf, (0, pad)).reshape(block_rows, LANES)
        num_blocks = 1
    else:
        n_main = num_blocks * block_elems
        rows_main = num_blocks * block_rows
        if n == n_main:
            # Fully block-aligned: zero-copy reshape.
            x_main = xf.reshape(rows_main, LANES)
            w_main = wf.reshape(rows_main, LANES)
        elif n % LANES == 0:
            # Lane-aligned: pass the full (rows,128) view zero-copy; the kernel
            # only touches the block-aligned prefix, row-tail handled in JAX.
            rows = n // LANES
            x_main = xf.reshape(rows, LANES)
            w_main = wf.reshape(rows, LANES)
            tail = jnp.dot(wf[n_main:], xf[n_main:])
        else:
            # Sub-128 remainder: slice only the block-aligned prefix (bounded
            # copy, no zero writes); ragged tail accumulated in JAX.
            x_main = xf[:n_main].reshape(rows_main, LANES)
            w_main = wf[:n_main].reshape(rows_main, LANES)
            tail = jnp.dot(wf[n_main:], xf[n_main:])

    if n_splits is None:
        n_splits = _num_tensorcores()
    if num_blocks < 2 or (num_blocks % n_splits) != 0:
        n_splits = 1
    blocks_per_split = num_blocks // n_splits

    block_bytes = block_elems * 4
    vmem_limit = int(min(56 << 20, max(24 << 20, 4 * block_bytes + (8 << 20))))

    partials = pl.pallas_call(
        _poisson_kernel,
        out_shape=jax.ShapeDtypeStruct((n_splits, SUBLANES, LANES), jnp.float32),
        grid=(n_splits, blocks_per_split),
        in_specs=[
            pl.BlockSpec((block_rows, LANES),
                         lambda c, k: (c * blocks_per_split + k, 0)),
            pl.BlockSpec((block_rows, LANES),
                         lambda c, k: (c * blocks_per_split + k, 0)),
        ],
        out_specs=pl.BlockSpec((1, SUBLANES, LANES), lambda c, k: (c, 0, 0)),
        compiler_params=pltpu.CompilerParams(
            dimension_semantics=("parallel", "arbitrary"),
            vmem_limit_bytes=vmem_limit),
    )(x_main, w_main)

    total = jnp.sum(partials) + tail          # final XLU-style reduce, once
    return jnp.exp(bf + total)                # bias + exp outside the kernel


def _reference(x, w, b):
    return jnp.exp(b.astype(jnp.float32) +
                   jnp.dot(w.astype(jnp.float32), x.astype(jnp.float32)))


if __name__ == "__main__":
    # Module __init__ implies: coefficients shape (size,), bias shape (1,).
    # NOTE: torch's `.random_(to=1)` would yield all-zero params (exp(0)=1);
    # deterministic non-trivial values are used so the kernel is exercised.
    key = jax.random.PRNGKey(0)
    k1, k2, k3, k4, k5 = jax.random.split(key, 5)
    bias = 0.1 * jax.random.normal(k3, (1,), dtype=jnp.float32)

    def check(size, block_rows, kx, kw):
        x = jax.random.normal(kx, (size,), dtype=jnp.float32)
        w = 0.01 * jax.random.normal(kw, (size,), dtype=jnp.float32)
        out = jax.block_until_ready(
            poisson_regression(x, w, bias, block_rows=block_rows,
                               force_pallas=True))
        ref = _reference(x, w, bias)
        assert out.shape == (1,), out.shape
        assert jnp.allclose(out, ref, rtol=1e-4, atol=1e-5), (size, out, ref)

    # Case 1: block-aligned, multi-step reduction (init/accumulate phases).
    check(4096, 8, k1, k2)
    # Case 2: lane-aligned with a row tail -> zero-copy prefix + JAX tail.
    check(4736, 8, k4, k2)
    # Case 3: sub-128 remainder with full blocks -> sliced prefix + JAX tail.
    check(4173, 8, k1, k5)
    # Case 4: tiny N forced through Pallas -> single padded block.
    check(333, 8, k4, k5)
    # Case 5: larger block exercising the chunked fori_loop MAC path.
    check(2 * 512 * 128, 512, k5, k1)

    # Fallback path (no force): tiny N uses XLA's fused dot+exp.
    xs = jax.random.normal(k1, (256,), dtype=jnp.float32)
    ws = 0.01 * jax.random.normal(k2, (256,), dtype=jnp.float32)
    out_fb = jax.block_until_ready(poisson_regression(xs, ws, bias))
    assert jnp.allclose(out_fb, _reference(xs, ws, bias), rtol=1e-4, atol=1e-5)

    print("KERNEL_OK")
</pallas_src>

<mosaic_0001>
module attributes {stable_mosaic.version = 11 : i64} {
  func.func @_poisson_kernel(%arg0: i32, %arg1: i32, %arg2: memref<8x128xf32, #tpu.memory_space<vmem>>, %arg3: memref<8x128xf32, #tpu.memory_space<vmem>>, %arg4: memref<1x8x128xf32, #tpu.memory_space<vmem>>) attributes {dimension_semantics = [#tpu.dimension_semantics<parallel>, #tpu.dimension_semantics<arbitrary>], iteration_bounds = array<i64: 1, 4>, scalar_prefetch = 0 : i64, scratch_operands = 0 : i64, tpu.core_type = #tpu.core_type<tc>, window_params = [{transform_indices = @transform_0, window_bounds = array<i64: 8, 128>}, {transform_indices = @transform_1, window_bounds = array<i64: 8, 128>}, {transform_indices = @transform_2, window_bounds = array<i64: 1, 8, 128>}]} {
    %c0_i32 = arith.constant 0 : i32
    %0 = arith.cmpi eq, %arg1, %c0_i32 : i32
    %1 = arith.extui %0 : i1 to i32
    %c0_i32_0 = arith.constant 0 : i32
    %2 = arith.cmpi ne, %1, %c0_i32_0 : i32
    scf.if %2 {
      %cst_10 = arith.constant 0.000000e+00 : f32
      %12 = vector.broadcast %cst_10 : f32 to vector<1x8x128xf32>
      %c0_11 = arith.constant 0 : index
      %c0_12 = arith.constant 0 : index
      %c0_13 = arith.constant 0 : index
      %13 = vector.load %arg4[%c0_11, %c0_12, %c0_13] : memref<1x8x128xf32, #tpu.memory_space<vmem>>, vector<1x8x128xf32>
      tpu.vector_store %arg4[%c0_11, %c0_12, %c0_13], %12 {strides = array<i32>} : memref<1x8x128xf32, #tpu.memory_space<vmem>>, vector<1x8x128xf32>,
    } else {
    }
    %c0 = arith.constant 0 : index
    %c0_1 = arith.constant 0 : index
    %3 = vector.load %arg2[%c0, %c0_1] : memref<8x128xf32, #tpu.memory_space<vmem>>, vector<8x128xf32>
    %c0_2 = arith.constant 0 : index
    %c0_3 = arith.constant 0 : index
    %4 = vector.load %arg3[%c0_2, %c0_3] : memref<8x128xf32, #tpu.memory_space<vmem>>, vector<8x128xf32>
    %5 = arith.mulf %3, %4 : vector<8x128xf32>
    %6 = vector.shape_cast %5 : vector<8x128xf32> to vector<1x8x128xf32>
    %cst = arith.constant dense<0.000000e+00> : vector<8x128xf32>
    %7 = vector.multi_reduction <add>, %6, %cst [0] : vector<1x8x128xf32> to vector<8x128xf32>
    %c0_4 = arith.constant 0 : index
    %c0_5 = arith.constant 0 : index
    %c0_6 = arith.constant 0 : index
    %8 = vector.load %arg4[%c0_4, %c0_5, %c0_6] : memref<1x8x128xf32, #tpu.memory_space<vmem>>, vector<1x8x128xf32>
    %9 = vector.shape_cast %7 : vector<8x128xf32> to vector<1x8x128xf32>
    %10 = arith.addf %8, %9 : vector<1x8x128xf32>
    %c0_7 = arith.constant 0 : index
    %c0_8 = arith.constant 0 : index
    %c0_9 = arith.constant 0 : index
    %11 = vector.load %arg4[%c0_7, %c0_8, %c0_9] : memref<1x8x128xf32, #tpu.memory_space<vmem>>, vector<1x8x128xf32>
    tpu.vector_store %arg4[%c0_7, %c0_8, %c0_9], %10 {strides = array<i32>} : memref<1x8x128xf32, #tpu.memory_space<vmem>>, vector<1x8x128xf32>,
    return
  }
  func.func @transform_0(%arg0: i32, %arg1: i32) -> (i32, i32) {
    %c4_i32 = arith.constant 4 : i32
    %0 = arith.muli %arg0, %c4_i32 : i32
    %1 = arith.addi %0, %arg1 : i32
    %c0_i32 = arith.constant 0 : i32
    %c0_i32_0 = arith.constant 0 : i32
    return %1, %c0_i32 : i32, i32
  }
  func.func @transform_1(%arg0: i32, %arg1: i32) -> (i32, i32) {
    %c4_i32 = arith.constant 4 : i32
    %0 = arith.muli %arg0, %c4_i32 : i32
    %1 = arith.addi %0, %arg1 : i32
    %c0_i32 = arith.constant 0 : i32
    %c0_i32_0 = arith.constant 0 : i32
    return %1, %c0_i32 : i32, i32
  }
  func.func @transform_2(%arg0: i32, %arg1: i32) -> (i32, i32, i32) {
    %c0_i32 = arith.constant 0 : i32
    %c0_i32_0 = arith.constant 0 : i32
    %c0_i32_1 = arith.constant 0 : i32
    return %arg0, %c0_i32, %c0_i32_0 : i32, i32, i32
  }
}

</mosaic_0001>

<llo_original>
// kernel: tpu_custom_call.1
$region0: #{tpu_custom_call.1}
  #allocation0 [shape = 'u32[]', space=smem, size = 0x4, offset = 0x4, fixed_abs, tag = 'smem constant byte address 0x4 - core index']
  #allocation1 [shape = 'u32[72,128]{1,0:T(1,128)}', space=vmem, size = 0x9000, scoped, tag = 'internal scratch']
  %s0 = inlined_call_operand.hbm [shape: f32[32,128], index: 0, kind: input, shape index: {}]
  %s1 = inlined_call_operand.hbm [shape: f32[32,128], index: 1, kind: input, shape index: {}]
  %s2 = inlined_call_operand.hbm [shape: f32[1,8,128], index: 2, kind: output, shape index: {}]
  %s3 = sld [smem:[#allocation0]]
  $region53: #{tpu_custom_call.1} parent=0
    _
  %s5 = ssub.s32 1, %s3
  %s6 = scalar_select 0, %s5, %s3
  $region1: #{tpu_custom_call.1} parent=0
    #allocation2 [shape = 'u8[8192]{0}', space=vmem, size = 0x2000, scoped, tag = 'input window, operand 0']
    #allocation3 [shape = 's32[2]{0}', space=sflag, size = 0x8, scoped, tag = 'scoped memory for tpu_custom_call.1']
    #allocation4 [shape = 's32[2]{0}', space=sflag, size = 0x8, scoped, tag = 'scoped memory for tpu_custom_call.1']
    #allocation5 [shape = 'u8[8192]{0}', space=vmem, size = 0x2000, scoped, tag = 'input window, operand 1']
    #allocation6 [shape = 's32[2]{0}', space=sflag, size = 0x8, scoped, tag = 'scoped memory for tpu_custom_call.1']
    #allocation7 [shape = 'u8[4096]{0}', space=vmem, size = 0x1000, scoped, tag = 'output window, operand 0, single buffered']
    %7 = vsyncpa [#allocation3], 0
    %s8 = scalar_lea.sflag [#allocation3], 1
    %9 = vsyncpa %s8, 0
    %10 = vsyncpa [#allocation6], 0
    %s11 = scalar_lea.sflag [#allocation6], 1
    %12 = vsyncpa %s11, 0
    %13 = vsyncpa [#allocation4], 0
    loop: start=0, step=1, limit=6
    $region2: #{tpu_custom_call.1} parent=1 // loop_pre_header
      _
    $region3: #{tpu_custom_call.1} parent=1 // loop_header
      %s15 = sphi 0, %s19
      %p16 = scmp.ge.s32.totalorder %s15, 6
      %s22 = sphi 0, %s34
      %s23 = sphi 0, %s30
      %s24 = sphi 0, %s22
      %s25 = sphi 0, %s23
      %s26 = sphi 0, %s24
      %s27 = sphi 0, %s25
      %s41 = sphi 0, %s43
      %s44 = sphi 0, %s41
      %s45 = sphi 0, %s44
      %s61 = sphi 0, %s45
      %s71 = sphi 0, %s73
      %s74 = sphi 0, %s71
      %s75 = sphi 0, %s74
      %s91 = sphi 0, %s75
      %s97 = sphi 0, %s99
      %s100 = sphi 0, %s97
      %s101 = sphi 0, %s100
      %s117 = sphi 0, %s101
    $region4: #{tpu_custom_call.1} parent=1 // loop_header_branch
      %18 = sbr.rel (%p16) target = $region8
    $region5: #{tpu_custom_call.1} parent=1 // loop_body
      %s20 = ssub.s32 %s15, 1
      %s21 = ssub.s32 %s15, 2
      %s28 = sadd.s32 1, %s23
      %p29 = scmp.ge.s32.totalorder %s28, 4
      %s30 = scalar_select %p29, 0, %s28
      %s31 = sadd.s32 1, %s22
      %s32 = scalar_select %p29, %s31, %s22
      %p33 = scmp.ge.s32.totalorder %s32, 1
      %s34 = scalar_select %p33, 0, %s32
      %s35 = smul.u32 %s22, 4
      %s36 = sadd.s32 %s35, %s23
      %s37 = smul.u32 %s34, 4
      %s38 = sadd.s32 %s37, %s30
      %s39 = ssub.s32 %s36, %s38
      %p40 = scmp.eq.s32.totalorder %s39, 0
      %s42 = sadd.s32 %s41, 1
      %s43 = scalar_select %p40, %s41, %s42
      %p46 = pneg %p40
      %p47 = scmp.eq.s32.totalorder %s15, 3
      %p48 = por %p46, %p47
      %p49 = scmp.ne.s32.totalorder %s41, %s44
      %p50 = scmp.eq.s32.totalorder %s15, 0
      %p51 = por %p49, %p50
      %p52 = scmp.ne.s32.totalorder %s41, %s44
      %p53 = scmp.eq.s32.totalorder %s20, 3
      %p54 = por %p52, %p53
      %p55 = scmp.ne.s32.totalorder %s44, %s45
      %p56 = scmp.eq.s32.totalorder %s20, 0
      %p57 = por %p55, %p56
      %p58 = scmp.ne.s32.totalorder %s44, %s45
      %p59 = scmp.eq.s32.totalorder %s21, 3
      %p60 = por %p58, %p59
      %p62 = scmp.ne.s32.totalorder %s45, %s61
      %p63 = scmp.eq.s32.totalorder %s21, 0
      %p64 = por %p62, %p63
      %s65 = smul.u32 %s22, 4
      %s66 = sadd.s32 %s65, %s23
      %s67 = smul.u32 %s34, 4
      %s68 = sadd.s32 %s67, %s30
      %s69 = ssub.s32 %s66, %s68
      %p70 = scmp.eq.s32.totalorder %s69, 0
      %s72 = sadd.s32 %s71, 1
      %s73 = scalar_select %p70, %s71, %s72
      %p76 = pneg %p70
      %p77 = scmp.eq.s32.totalorder %s15, 3
      %p78 = por %p76, %p77
      %p79 = scmp.ne.s32.totalorder %s71, %s74
      %p80 = scmp.eq.s32.totalorder %s15, 0
      %p81 = por %p79, %p80
      %p82 = scmp.ne.s32.totalorder %s71, %s74
      %p83 = scmp.eq.s32.totalorder %s20, 3
      %p84 = por %p82, %p83
      %p85 = scmp.ne.s32.totalorder %s74, %s75
      %p86 = scmp.eq.s32.totalorder %s20, 0
      %p87 = por %p85, %p86
      %p88 = scmp.ne.s32.totalorder %s74, %s75
      %p89 = scmp.eq.s32.totalorder %s21, 3
      %p90 = por %p88, %p89
      %p92 = scmp.ne.s32.totalorder %s75, %s91
      %p93 = scmp.eq.s32.totalorder %s21, 0
      %p94 = por %p92, %p93
      %s95 = ssub.s32 %s22, %s34
      %p96 = scmp.eq.s32.totalorder %s95, 0
      %s98 = sadd.s32 %s97, 1
      %s99 = scalar_select %p96, %s97, %s98
      %p102 = pneg %p96
      %p103 = scmp.eq.s32.totalorder %s15, 3
      %p104 = por %p102, %p103
      %p105 = scmp.ne.s32.totalorder %s97, %s100
      %p106 = scmp.eq.s32.totalorder %s15, 0
      %p107 = por %p105, %p106
      %p108 = scmp.ne.s32.totalorder %s97, %s100
      %p109 = scmp.eq.s32.totalorder %s20, 3
      %p110 = por %p108, %p109
      %p111 = scmp.ne.s32.totalorder %s100, %s101
      %p112 = scmp.eq.s32.totalorder %s20, 0
      %p113 = por %p111, %p112
      %p114 = scmp.ne.s32.totalorder %s100, %s101
      %p115 = scmp.eq.s32.totalorder %s21, 3
      %p116 = por %p114, %p115
      %p118 = scmp.ne.s32.totalorder %s101, %s117
      %p119 = scmp.eq.s32.totalorder %s21, 0
      %p120 = por %p118, %p119
      %p121 = scmp.le.s32.totalorder 1, %s15
      %p122 = scmp.lt.s32.totalorder %s15, 5
      %p123 = pnand %p121, %p122
      %p124 = pneg %p123
      // Predicated region
      $region9: #{tpu_custom_call.1} parent=5 // pred_check
        _
      $region10: #{tpu_custom_call.1} parent=5 // pred_check_branch
        %126 = sbr.rel (%p123) target = $region12
      $region11: #{tpu_custom_call.1} parent=5 // pred_region
        %s127 = ssub.s32 %s15, 1
      $region12: #{tpu_custom_call.1} parent=5 // pred_fallthru
        _
      %p128 = scmp.lt.s32.totalorder %s15, 4
      // Predicated region
      $region13: #{tpu_custom_call.1} parent=5 // pred_check
        %p129 = pneg %p128
      $region14: #{tpu_custom_call.1} parent=5 // pred_check_branch
        %131 = sbr.rel (%p129) target = $region16
      $region15: #{tpu_custom_call.1} parent=5 // pred_region
        // Predicated region
        $region17: #{tpu_custom_call.1} parent=15 // pred_check
          %p132 = pneg %p51
        $region18: #{tpu_custom_call.1} parent=15 // pred_check_branch
          %134 = sbr.rel (%p132) target = $region20
        $region19: #{tpu_custom_call.1} parent=15 // pred_region
          %s135 = sand.u32 %s41, 1
          %s136 = scalar_lea.sflag [#allocation3], %s135
          %s137 = sand.u32 %s41, 1
          %s138 = smul.addr %s137, 8
          %s139 = scalar_lea.vmem [#allocation2], %s138
          %s140 = smul.u32 %s22, 4
          %s141 = sadd.s32 %s140, %s23
          %143 = vsyncadd %s136, 0
          %s144 = smul.addr %s141, 8
          %s145 = scalar_lea.hbm %s0, %s144
          %s147 = sshll.u32 %s145, 4
          %s148 = int_to_ptr.hbm [resolvable:$true] %s147
          %s149 = sshll.u32 %s139, 4
          %s150 = int_to_ptr.vmem [resolvable:$true] %s149
          %152 = dma.hbm_to_vmem [thread:$0]  %s148, 128, %s150, %s136
        $region20: #{tpu_custom_call.1} parent=15 // pred_fallthru
          _
        // Predicated region
        $region21: #{tpu_custom_call.1} parent=15 // pred_check
          %p153 = pneg %p81
        $region22: #{tpu_custom_call.1} parent=15 // pred_check_branch
          %155 = sbr.rel (%p153) target = $region24
        $region23: #{tpu_custom_call.1} parent=15 // pred_region
          %s156 = sand.u32 %s71, 1
          %s157 = scalar_lea.sflag [#allocation6], %s156
          %s158 = sand.u32 %s71, 1
          %s159 = smul.addr %s158, 8
          %s160 = scalar_lea.vmem [#allocation5], %s159
          %s161 = smul.u32 %s22, 4
          %s162 = sadd.s32 %s161, %s23
          %164 = vsyncadd %s157, 0
          %s165 = smul.addr %s162, 8
          %s166 = scalar_lea.hbm %s1, %s165
          %s168 = sshll.u32 %s166, 4
          %s169 = int_to_ptr.hbm [resolvable:$true] %s168
          %s170 = sshll.u32 %s160, 4
          %s171 = int_to_ptr.vmem [resolvable:$true] %s170
          %173 = dma.hbm_to_vmem [thread:$0]  %s169, 128, %s171, %s157
        $region24: #{tpu_custom_call.1} parent=15 // pred_fallthru
          _
      $region16: #{tpu_custom_call.1} parent=5 // pred_fallthru
        _
      %p174 = scmp.le.s32.totalorder 1, %s15
      %p175 = scmp.lt.s32.totalorder %s15, 5
      %p176 = pnand %p174, %p175
      %p177 = pneg %p176
      // Predicated region
      $region25: #{tpu_custom_call.1} parent=5 // pred_check
        _
      $region26: #{tpu_custom_call.1} parent=5 // pred_check_branch
        %179 = sbr.rel (%p176) target = $region28
      $region27: #{tpu_custom_call.1} parent=5 // pred_region
        %s180 = ssub.s32 %s15, 1
        %s181 = sand.u32 %s44, 1
        %s182 = scalar_lea.sflag [#allocation3], %s181
        %s183 = sand.u32 %s44, 1
        %s184 = smul.addr %s183, 8
        %s185 = scalar_lea.vmem [#allocation2], %s184
        // Predicated region
        $region29: #{tpu_custom_call.1} parent=27 // pred_check
          %p186 = pneg %p57
        $region30: #{tpu_custom_call.1} parent=27 // pred_check_branch
          %188 = sbr.rel (%p186) target = $region32
        $region31: #{tpu_custom_call.1} parent=27 // pred_region
          %190 = dma.done %s182, 128
        $region32: #{tpu_custom_call.1} parent=27 // pred_fallthru
          _
        %s191 = sand.u32 %s74, 1
        %s192 = scalar_lea.sflag [#allocation6], %s191
        %s193 = sand.u32 %s74, 1
        %s194 = smul.addr %s193, 8
        %s195 = scalar_lea.vmem [#allocation5], %s194
        // Predicated region
        $region33: #{tpu_custom_call.1} parent=27 // pred_check
          %p196 = pneg %p87
        $region34: #{tpu_custom_call.1} parent=27 // pred_check_branch
          %198 = sbr.rel (%p196) target = $region36
        $region35: #{tpu_custom_call.1} parent=27 // pred_region
          %200 = dma.done %s192, 128
        $region36: #{tpu_custom_call.1} parent=27 // pred_fallthru
          _
        %s201 = sand.u32 %s44, 1
        %s202 = scalar_lea.sflag [#allocation3], %s201
        %s203 = sand.u32 %s44, 1
        %s204 = smul.addr %s203, 8
        %s205 = scalar_lea.vmem [#allocation2], %s204
        %p206 = pneg %p57
        %p207 = pneg %p54
        %s208 = sand.u32 %s74, 1
        %s209 = scalar_lea.sflag [#allocation6], %s208
        %s210 = sand.u32 %s74, 1
        %s211 = smul.addr %s210, 8
        %s212 = scalar_lea.vmem [#allocation5], %s211
        %p213 = pneg %p87
        %p214 = pneg %p84
        %p215 = pneg %p113
        %p216 = pneg %p110
        %s217 = smul.u32 %s24, 4
        %s218 = sadd.s32 %s217, %s25
        %s219 = smul.u32 %s24, 4
        %s220 = sadd.s32 %s219, %s25
        %p221 = scmp.eq.s32.totalorder %s25, 0
        // Predicated region
        $region37: #{tpu_custom_call.1} parent=27 // pred_check
          %p222 = pneg %p221
        $region38: #{tpu_custom_call.1} parent=27 // pred_check_branch
          %224 = sbr.rel (%p222) target = $region40
        $region39: #{tpu_custom_call.1} parent=27 // pred_region
          %225 = vst [vmem:[#allocation7] sm:$0xff] 0.0
        $region40: #{tpu_custom_call.1} parent=27 // pred_fallthru
          _
        %v226 = vld [vmem:[%s185] sm:$0xff]
        %v227 = vld [vmem:[%s195] sm:$0xff]
        %v228 = vmul.f32 %v226, %v227
        %v229 = vadd.f32 %v228, 0.0
        %v230 = vld [vmem:[#allocation7] sm:$0xff]
        %v231 = vadd.f32 %v230, %v229
        %232 = vst [vmem:[#allocation7] sm:$0xff] %v231
        // Predicated region
        $region41: #{tpu_custom_call.1} parent=27 // pred_check
          %p233 = pneg %p110
        $region42: #{tpu_custom_call.1} parent=27 // pred_check_branch
          %235 = sbr.rel (%p233) target = $region44
        $region43: #{tpu_custom_call.1} parent=27 // pred_region
          %237 = vsyncadd [#allocation4], 0
          %s238 = smul.addr %s24, 8
          %s239 = scalar_lea.hbm %s2, %s238
          %s241 = sshll.u32 [#allocation7], 4
          %s242 = int_to_ptr.vmem [resolvable:$true] %s241
          %s243 = sshll.u32 %s239, 4
          %s244 = int_to_ptr.hbm [resolvable:$true] %s243
          %246 = dma.vmem_to_hbm [thread:$0]  %s242, 128, %s244, [#allocation4]
        $region44: #{tpu_custom_call.1} parent=27 // pred_fallthru
          _
        // Predicated region
        $region45: #{tpu_custom_call.1} parent=27 // pred_check
          %p247 = pneg %p110
        $region46: #{tpu_custom_call.1} parent=27 // pred_check_branch
          %249 = sbr.rel (%p247) target = $region48
        $region47: #{tpu_custom_call.1} parent=27 // pred_region
          %251 = dma.done [#allocation4], 128
        $region48: #{tpu_custom_call.1} parent=27 // pred_fallthru
          _
      $region28: #{tpu_custom_call.1} parent=5 // pred_fallthru
        _
      %p252 = scmp.le.s32.totalorder 2, %s15
      // Predicated region
      $region49: #{tpu_custom_call.1} parent=5 // pred_check
        %p253 = pneg %p252
      $region50: #{tpu_custom_call.1} parent=5 // pred_check_branch
        %255 = sbr.rel (%p253) target = $region52
      $region51: #{tpu_custom_call.1} parent=5 // pred_region
        %s256 = ssub.s32 %s15, 2
      $region52: #{tpu_custom_call.1} parent=5 // pred_fallthru
        _
    $region6: #{tpu_custom_call.1} parent=1 // loop_footer
      %s19 = sadd.s32 1, %s15
    $region7: #{tpu_custom_call.1} parent=1 // loop_footer_branch
      %14 = sbr.rel target = $region3
    $region8: #{tpu_custom_call.1} parent=1 // loop_exit
      _
    %257 = vsyncpa [#allocation3], 1
    %s258 = scalar_lea.sflag [#allocation3], 1
    %259 = vsyncpa %s258, 1
    %260 = vsyncpa [#allocation6], 1
    %s261 = scalar_lea.sflag [#allocation6], 1
    %262 = vsyncpa %s261, 1
    %263 = vsyncpa [#allocation4], 1
    %s264 = scalar_lea.sflag [#allocation4], 1
    %265 = vsyncpa %s264, 1

</llo_original>
